<compile_context>
chip_gen: v6e
topology: v6e:2x2x1
jax: 0.10.0
libtpu: 0.0.40
codegen_flags: <defaults>
</compile_context>

<pallas_src>
import functools

import jax
import jax.numpy as jnp
from jax.experimental import pallas as pl
from jax.experimental.pallas import tpu as pltpu


def head_kernel(x_ref, wqkv_ref, bqkv_ref, o_ref, *, head_size, compute_dtype):
    B, T, C = x_ref.shape
    H = head_size

    # ---- Fused QKV projection: single MXU matmul over all batches ----
    x2 = x_ref[...].reshape(B * T, C)                                  # (B*T, C)
    qkv = jnp.dot(x2.astype(compute_dtype),
                  wqkv_ref[...].astype(compute_dtype),
                  preferred_element_type=jnp.float32)                  # (B*T, 3H) f32
    qkv = qkv + bqkv_ref[...].astype(jnp.float32)                      # bias add in f32

    k = qkv[:, 0 * H:1 * H].reshape(B, T, H)
    q = qkv[:, 1 * H:2 * H].reshape(B, T, H)
    v = qkv[:, 2 * H:3 * H].reshape(B, T, H)

    # ---- Attention scores: contract last dims directly (no explicit k.T) ----
    # No 1/sqrt(head_size) scaling, as in the PyTorch module.
    wei = jnp.einsum("btd,bsd->bts",
                     q.astype(compute_dtype), k.astype(compute_dtype),
                     preferred_element_type=jnp.float32)               # (B, T, T)

    # Causal mask: trill[:T, :T] == 0  <=>  col > row
    row = jax.lax.broadcasted_iota(jnp.int32, (T, T), 0)
    col = jax.lax.broadcasted_iota(jnp.int32, (T, T), 1)
    wei = jnp.where((row >= col)[None, :, :], wei, -jnp.inf)

    # Softmax over dim=1 of (B, T, T) — the QUERY axis (module quirk). f32 math.
    m = jnp.max(wei, axis=1, keepdims=True)                            # (B, 1, T)
    e = jnp.exp(wei - m)                                               # -inf -> 0
    denom = jnp.sum(e, axis=1, keepdims=True)                          # (B, 1, T), >= 1
    p = e * pl.reciprocal(denom, approx=True)                          # EUP, not VPU divide

    # Dropout: identity (eval mode).

    out = jnp.einsum("bts,bsh->bth",
                     p.astype(compute_dtype), v.astype(compute_dtype),
                     preferred_element_type=jnp.float32)               # (B, T, H)
    o_ref[...] = out.astype(o_ref.dtype)


def head_forward(x, wk, bk, wq, bq, wv, bv, *, compute_dtype=jnp.float32):
    """x: (B, T, C) float32.  w*: (C, H), b*: (1, H).

    compute_dtype: dtype for MXU matmul inputs (jnp.bfloat16 recommended on
    v6e/v7x for real shapes); mask/softmax/bias math always stays float32.
    """
    B, T, C = x.shape
    H = wk.shape[1]

    # Fuse the three projections once, outside the kernel (order: k, q, v).
    w_qkv = jnp.concatenate([wk, wq, wv], axis=1)                      # (C, 3H)
    b_qkv = jnp.concatenate([bk, bq, bv], axis=1)                      # (1, 3H)

    kernel = functools.partial(head_kernel, head_size=H, compute_dtype=compute_dtype)

    return pl.pallas_call(
        kernel,
        out_shape=jax.ShapeDtypeStruct((B, T, H), x.dtype),
        grid_spec=pltpu.PrefetchScalarGridSpec(
            num_scalar_prefetch=0,
            grid=(1,),  # one grid step: all batches handled together
            in_specs=[
                pl.BlockSpec((B, T, C), lambda i: (0, 0, 0)),          # x (all batches)
                pl.BlockSpec((C, 3 * H), lambda i: (0, 0)),            # fused W_qkv
                pl.BlockSpec((1, 3 * H), lambda i: (0, 0)),            # fused b_qkv
            ],
            out_specs=pl.BlockSpec((B, T, H), lambda i: (0, 0, 0)),
        ),
        compiler_params=pltpu.CompilerParams(
            dimension_semantics=("arbitrary",),
        ),
    )(x, w_qkv, b_qkv)


def head_reference(x, wk, bk, wq, bq, wv, bv):
    """Pure-JAX reference mirroring the PyTorch forward (eval mode)."""
    k = x @ wk + bk                                  # (B, T, H)
    q = x @ wq + bq
    v = x @ wv + bv
    wei = jnp.einsum("btd,bsd->bts", q, k)           # (B, T, T)
    T = x.shape[1]
    tril = jnp.tril(jnp.ones((T, T), dtype=bool))
    wei = jnp.where(tril[None], wei, -jnp.inf)
    wei = jax.nn.softmax(wei, axis=1)                # softmax over dim=1 (query axis)
    return jnp.einsum("bts,bsh->bth", wei, v)


if __name__ == "__main__":
    # Small shapes consistent with the module: (B, T, C) input, head_size H.
    B, T, C, H = 2, 8, 32, 16

    key = jax.random.PRNGKey(0)
    kx, kwk, kbk, kwq, kbq, kwv, kbv = jax.random.split(key, 7)

    x = jax.random.normal(kx, (B, T, C), dtype=jnp.float32)

    scale = 1.0 / jnp.sqrt(jnp.float32(C))
    wk = jax.random.normal(kwk, (C, H), dtype=jnp.float32) * scale
    bk = jax.random.normal(kbk, (1, H), dtype=jnp.float32) * 0.1
    wq = jax.random.normal(kwq, (C, H), dtype=jnp.float32) * scale
    bq = jax.random.normal(kbq, (1, H), dtype=jnp.float32) * 0.1
    wv = jax.random.normal(kwv, (C, H), dtype=jnp.float32) * scale
    bv = jax.random.normal(kbv, (1, H), dtype=jnp.float32) * 0.1

    ref = head_reference(x, wk, bk, wq, bq, wv, bv)

    # f32 path (exact semantics; tolerance accounts only for the approx reciprocal).
    out = head_forward(x, wk, bk, wq, bq, wv, bv)
    out = jax.block_until_ready(out)
    assert out.shape == (B, T, H)
    assert jnp.allclose(out, ref, atol=5e-3, rtol=5e-3), "f32 path mismatch vs reference"

    # bf16-MXU path (v6e/v7x recommendation): sanity-check it runs and stays close.
    out_bf16 = head_forward(x, wk, bk, wq, bq, wv, bv, compute_dtype=jnp.bfloat16)
    out_bf16 = jax.block_until_ready(out_bf16)
    assert bool(jnp.all(jnp.isfinite(out_bf16)))
    assert jnp.allclose(out_bf16, ref, atol=2e-1, rtol=1e-1), "bf16 path mismatch vs reference"

    print("KERNEL_OK")
</pallas_src>

<mosaic_0001>
module attributes {stable_mosaic.version = 11 : i64} {
  func.func @head_kernel(%arg0: i32, %arg1: memref<2x8x32xf32, #tpu.memory_space<vmem>>, %arg2: memref<32x48xf32, #tpu.memory_space<vmem>>, %arg3: memref<1x48xf32, #tpu.memory_space<vmem>>, %arg4: memref<2x8x16xf32, #tpu.memory_space<vmem>>) attributes {dimension_semantics = [#tpu.dimension_semantics<arbitrary>], iteration_bounds = array<i64: 1>, scalar_prefetch = 0 : i64, scratch_operands = 0 : i64, tpu.core_type = #tpu.core_type<tc>, window_params = [{pipeline_mode = #tpu.pipeline_mode<synchronous>, transform_indices = @transform_0, window_bounds = array<i64: 2, 8, 32>}, {pipeline_mode = #tpu.pipeline_mode<synchronous>, transform_indices = @transform_1, window_bounds = array<i64: 32, 48>}, {pipeline_mode = #tpu.pipeline_mode<synchronous>, transform_indices = @transform_2, window_bounds = array<i64: 1, 48>}, {pipeline_mode = #tpu.pipeline_mode<synchronous>, transform_indices = @transform_3, window_bounds = array<i64: 2, 8, 16>}]} {
    %c0 = arith.constant 0 : index
    %c0_0 = arith.constant 0 : index
    %c0_1 = arith.constant 0 : index
    %0 = vector.load %arg1[%c0, %c0_0, %c0_1] : memref<2x8x32xf32, #tpu.memory_space<vmem>>, vector<2x8x32xf32>
    %1 = vector.shape_cast %0 : vector<2x8x32xf32> to vector<16x32xf32>
    %c0_2 = arith.constant 0 : index
    %c0_3 = arith.constant 0 : index
    %2 = vector.load %arg2[%c0_2, %c0_3] : memref<32x48xf32, #tpu.memory_space<vmem>>, vector<32x48xf32>
    %cst = arith.constant dense<0.000000e+00> : vector<16x48xf32>
    %3 = tpu.matmul %1, %2, %cst {dimension_numbers = #tpu.dot_dimension_numbers<[1], [0], [0], [1], [0, 0, 1, 1], [], []>} : vector<16x32xf32>, vector<32x48xf32>, vector<16x48xf32> -> vector<16x48xf32>
    %c0_4 = arith.constant 0 : index
    %c0_5 = arith.constant 0 : index
    %4 = vector.load %arg3[%c0_4, %c0_5] : memref<1x48xf32, #tpu.memory_space<vmem>>, vector<1x48xf32>
    %5 = vector.broadcast %4 : vector<1x48xf32> to vector<16x48xf32>
    %6 = arith.addf %3, %5 : vector<16x48xf32>
    %7 = vector.extract_strided_slice %6 {offsets = [0, 0], sizes = [16, 16], strides = [1, 1]} : vector<16x48xf32> to vector<16x16xf32>
    %8 = vector.shape_cast %7 : vector<16x16xf32> to vector<2x8x16xf32>
    %9 = vector.extract_strided_slice %6 {offsets = [0, 16], sizes = [16, 16], strides = [1, 1]} : vector<16x48xf32> to vector<16x16xf32>
    %10 = vector.shape_cast %9 : vector<16x16xf32> to vector<2x8x16xf32>
    %11 = vector.extract_strided_slice %6 {offsets = [0, 32], sizes = [16, 16], strides = [1, 1]} : vector<16x48xf32> to vector<16x16xf32>
    %12 = vector.shape_cast %11 : vector<16x16xf32> to vector<2x8x16xf32>
    "tpu.trace_start"() <{level = 10 : i32, message = "btd,bsd->bts"}> : () -> ()
    %cst_6 = arith.constant dense<0.000000e+00> : vector<2x8x8xf32>
    %13 = tpu.matmul %10, %8, %cst_6 {dimension_numbers = #tpu.dot_dimension_numbers<[2], [2], [1], [1], [0, 0, 0, 1, 1, 1], [0], [0]>} : vector<2x8x16xf32>, vector<2x8x16xf32>, vector<2x8x8xf32> -> vector<2x8x8xf32>
    "tpu.trace_stop"() : () -> ()
    %14 = tpu.iota {dimensions = array<i32: 0>} : vector<8x8xi32>
    %15 = tpu.iota {dimensions = array<i32: 1>} : vector<8x8xi32>
    %16 = arith.cmpi sge, %14, %15 : vector<8x8xi32>
    %17 = vector.shape_cast %16 : vector<8x8xi1> to vector<1x8x8xi1>
    %cst_7 = arith.constant 0xFF800000 : f32
    %18 = vector.shape_cast %17 : vector<1x8x8xi1> to vector<1x8x8xi1>
    %19 = vector.broadcast %18 : vector<1x8x8xi1> to vector<2x8x8xi1>
    %20 = vector.broadcast %cst_7 : f32 to vector<2x8x8xf32>
    %21 = arith.select %19, %13, %20 : vector<2x8x8xi1>, vector<2x8x8xf32>
    %cst_8 = arith.constant dense<0xFF800000> : vector<2x8xf32>
    %22 = vector.multi_reduction <maximumf>, %21, %cst_8 [1] : vector<2x8x8xf32> to vector<2x8xf32>
    %23 = vector.shape_cast %22 : vector<2x8xf32> to vector<2x1x8xf32>
    %24 = vector.broadcast %23 : vector<2x1x8xf32> to vector<2x8x8xf32>
    %25 = arith.subf %21, %24 : vector<2x8x8xf32>
    %26 = math.exp %25 : vector<2x8x8xf32>
    %cst_9 = arith.constant dense<0.000000e+00> : vector<2x8xf32>
    %27 = vector.multi_reduction <add>, %26, %cst_9 [1] : vector<2x8x8xf32> to vector<2x8xf32>
    %28 = vector.shape_cast %27 : vector<2x8xf32> to vector<2x1x8xf32>
    %29 = tpu.reciprocal %28 {approx = true} : vector<2x1x8xf32> -> vector<2x1x8xf32>
    %30 = vector.broadcast %29 : vector<2x1x8xf32> to vector<2x8x8xf32>
    %31 = arith.mulf %26, %30 : vector<2x8x8xf32>
    "tpu.trace_start"() <{level = 10 : i32, message = "bts,bsh->bth"}> : () -> ()
    %cst_10 = arith.constant dense<0.000000e+00> : vector<2x8x16xf32>
    %32 = tpu.matmul %31, %12, %cst_10 {dimension_numbers = #tpu.dot_dimension_numbers<[2], [1], [1], [2], [0, 0, 0, 1, 1, 2], [0], [0]>} : vector<2x8x8xf32>, vector<2x8x16xf32>, vector<2x8x16xf32> -> vector<2x8x16xf32>
    "tpu.trace_stop"() : () -> ()
    %c0_11 = arith.constant 0 : index
    %c0_12 = arith.constant 0 : index
    %c0_13 = arith.constant 0 : index
    %33 = vector.load %arg4[%c0_11, %c0_12, %c0_13] : memref<2x8x16xf32, #tpu.memory_space<vmem>>, vector<2x8x16xf32>
    tpu.vector_store %arg4[%c0_11, %c0_12, %c0_13], %32 {strides = array<i32>} : memref<2x8x16xf32, #tpu.memory_space<vmem>>, vector<2x8x16xf32>,
    return
  }
  func.func @transform_0(%arg0: i32) -> (i32, i32, i32) {
    %c0_i32 = arith.constant 0 : i32
    %c0_i32_0 = arith.constant 0 : i32
    %c0_i32_1 = arith.constant 0 : i32
    %c0_i32_2 = arith.constant 0 : i32
    return %c0_i32, %c0_i32_0, %c0_i32_1 : i32, i32, i32
  }
  func.func @transform_1(%arg0: i32) -> (i32, i32) {
    %c0_i32 = arith.constant 0 : i32
    %c0_i32_0 = arith.constant 0 : i32
    %c0_i32_1 = arith.constant 0 : i32
    return %c0_i32, %c0_i32_0 : i32, i32
  }
  func.func @transform_2(%arg0: i32) -> (i32, i32) {
    %c0_i32 = arith.constant 0 : i32
    %c0_i32_0 = arith.constant 0 : i32
    %c0_i32_1 = arith.constant 0 : i32
    return %c0_i32, %c0_i32_0 : i32, i32
  }
  func.func @transform_3(%arg0: i32) -> (i32, i32, i32) {
    %c0_i32 = arith.constant 0 : i32
    %c0_i32_0 = arith.constant 0 : i32
    %c0_i32_1 = arith.constant 0 : i32
    %c0_i32_2 = arith.constant 0 : i32
    return %c0_i32, %c0_i32_0, %c0_i32_1 : i32, i32, i32
  }
}

</mosaic_0001>

<llo_original>
// kernel: tpu_custom_call.1
$region0: #{tpu_custom_call.1}
  #allocation0 [shape = 'u32[]', space=smem, size = 0x4, offset = 0x4, fixed_abs, tag = 'smem constant byte address 0x4 - core index']
  #allocation1 [shape = 'u32[144,128]{1,0:T(1,128)}', space=vmem, size = 0x12000, scoped, tag = 'internal scratch']
  %s0 = inlined_call_operand.hbm [shape: f32[2,8,32], index: 0, kind: input, shape index: {}]
  %s1 = inlined_call_operand.hbm [shape: f32[32,48], index: 1, kind: input, shape index: {}]
  %s2 = inlined_call_operand.vmem [shape: f32[1,48], index: 2, kind: input, shape index: {}]
  %s3 = inlined_call_operand.hbm [shape: f32[2,8,16], index: 3, kind: output, shape index: {}]
  %s4 = sld [smem:[#allocation0]]
  $region30: #{tpu_custom_call.1} parent=0
    _
  %s6 = ssub.s32 1, %s4
  %s7 = scalar_select 0, %s6, %s4
  $region1: #{tpu_custom_call.1} parent=0
    #allocation2 [shape = 'u8[8192]{0}', space=vmem, size = 0x2000, scoped, tag = 'input window, operand 0, single buffered']
    #allocation3 [shape = 's32[1]{0}', space=sflag, size = 0x4, scoped, tag = 'scoped memory for tpu_custom_call.1']
    #allocation4 [shape = 's32[1]{0}', space=sflag, size = 0x4, scoped, tag = 'scoped memory for tpu_custom_call.1']
    #allocation5 [shape = 'u8[16384]{0}', space=vmem, size = 0x4000, scoped, tag = 'input window, operand 1, single buffered']
    #allocation6 [shape = 's32[1]{0}', space=sflag, size = 0x4, scoped, tag = 'scoped memory for tpu_custom_call.1']
    #allocation7 [shape = 'u8[8192]{0}', space=vmem, size = 0x2000, scoped, tag = 'output window, operand 0, single buffered']
    %8 = vsyncpa [#allocation3], 0
    %9 = vsyncpa [#allocation6], 0
    %10 = vsyncpa [#allocation4], 0
    // Predicated region
    $region2: #{tpu_custom_call.1} parent=1 // pred_check
      _
    $region3: #{tpu_custom_call.1} parent=1 // pred_check_branch
      %12 = sbr.rel (0) target = $region5
    $region4: #{tpu_custom_call.1} parent=1 // pred_region
      %s14 = ssub.s32 256, 256
      %15 = vsyncadd [#allocation3], %s14
      %s16 = sshll.u32 [#allocation2], 4
      %s17 = int_to_ptr.vmem [resolvable:$true] %s16
      %22 = dma.hbm_to_vmem [thread:$0]  %s0, 256, %s17, [#allocation3], 128, 128, 8
    $region5: #{tpu_custom_call.1} parent=1 // pred_fallthru
      _
    // Predicated region
    $region6: #{tpu_custom_call.1} parent=1 // pred_check
      _
    $region7: #{tpu_custom_call.1} parent=1 // pred_check_branch
      %24 = sbr.rel (0) target = $region9
    $region8: #{tpu_custom_call.1} parent=1 // pred_region
      %s26 = ssub.s32 512, 512
      %27 = vsyncadd [#allocation6], %s26
      %s28 = sshll.u32 [#allocation5], 4
      %s29 = int_to_ptr.vmem [resolvable:$true] %s28
      %34 = dma.hbm_to_vmem [thread:$0]  %s1, 512, %s29, [#allocation6], 128, 128, 8
    $region9: #{tpu_custom_call.1} parent=1 // pred_fallthru
      _
    // Predicated region
    $region10: #{tpu_custom_call.1} parent=1 // pred_check
      _
    $region11: #{tpu_custom_call.1} parent=1 // pred_check_branch
      %36 = sbr.rel (0) target = $region13
    $region12: #{tpu_custom_call.1} parent=1 // pred_region
      _
    $region13: #{tpu_custom_call.1} parent=1 // pred_fallthru
      _
    // Predicated region
    $region14: #{tpu_custom_call.1} parent=1 // pred_check
      _
    $region15: #{tpu_custom_call.1} parent=1 // pred_check_branch
      %38 = sbr.rel (0) target = $region17
    $region16: #{tpu_custom_call.1} parent=1 // pred_region
      %39 = dma.done [#allocation3], 256
    $region17: #{tpu_custom_call.1} parent=1 // pred_fallthru
      _
    // Predicated region
    $region18: #{tpu_custom_call.1} parent=1 // pred_check
      _
    $region19: #{tpu_custom_call.1} parent=1 // pred_check_branch
      %41 = sbr.rel (0) target = $region21
    $region20: #{tpu_custom_call.1} parent=1 // pred_region
      %42 = dma.done [#allocation6], 512
    $region21: #{tpu_custom_call.1} parent=1 // pred_fallthru
      _
    %v43 = vld [vmem:[#allocation2] sm:$0xff]
    %v44 = vld [vmem:[#allocation2 + $0x8] sm:$0xff]
    %v45 = vld [vmem:[#allocation5] sm:$0xff]
    %v46 = vld [vmem:[#allocation5 + $0x8] sm:$0xff]
    %v47 = vld [vmem:[#allocation5 + $0x10] sm:$0xff]
    %v48 = vld [vmem:[#allocation5 + $0x18] sm:$0xff]
    %v49 = vld [vmem:[%s2] sm:$0x1]
    %v51 = vlaneseq
    %v52 = vshrl.u32 %v51, 7
    %v53 = vsub.s32 0, %v52
    %v54 = vrot.slane %v49, %v53
    %vm56 = vcmask 261120
    %v58 = vsel %vm56, %v43, 0
    %v61 = vsel %vm56, %v44, 0
    %63 = vmatprep.subr.mxu0 0.0
    %64 = vmatpush1.msra.mxu0 0.0
    %65 = vmatprep.subr.mxu0 0.0
    %66 = vmatpush1.msra.mxu0 0.0
    %67 = vmatprep.subr.mxu0 0.0
    %68 = vmatpush1.msra.mxu0 0.0
    %69 = vmatprep.subr.mxu0 0.0
    %70 = vmatpush1.msra.mxu0 0.0
    %71 = vmatprep.subr.mxu0 0.0
    %72 = vmatpush1.msra.mxu0 0.0
    %73 = vmatprep.subr.mxu0 0.0
    %74 = vmatpush1.msra.mxu0 0.0
    %75 = vmatprep.subr.mxu0 0.0
    %76 = vmatpush1.msra.mxu0 0.0
    %77 = vmatprep.subr.mxu0 0.0
    %78 = vmatpush1.msra.mxu0 0.0
    %79 = vmatprep.subr.mxu0 0.0
    %80 = vmatpush1.msra.mxu0 0.0
    %81 = vmatprep.subr.mxu0 0.0
    %82 = vmatpush1.msra.mxu0 0.0
    %83 = vmatprep.subr.mxu0 0.0
    %84 = vmatpush1.msra.mxu0 0.0
    %85 = vmatprep.subr.mxu0 0.0
    %86 = vmatpush1.msra.mxu0 0.0
    %87 = vmatprep.subr.mxu0 0.0
    %88 = vmatpush1.msra.mxu0 %v48
    %89 = vmatprep.subr.mxu0 0.0
    %90 = vmatpush1.msra.mxu0 %v47
    %91 = vmatprep.subr.mxu0 0.0
    %92 = vmatpush1.msra.mxu0 %v46
    %93 = vmatprep.subr.mxu0 0.0
    %94 = vmatpush1.msra.mxu0 %v45
    %95 = vmatprep.subr.mxu0 0.0
    %96 = vmatpush2.msra.mxu0 0.0
    %97 = vmatprep.subr.mxu0 0.0
    %98 = vmatpush2.msra.mxu0 0.0
    %99 = vmatprep.subr.mxu0 0.0
    %100 = vmatpush2.msra.mxu0 0.0
    %101 = vmatprep.subr.mxu0 0.0
    %102 = vmatpush2.msra.mxu0 0.0
    %103 = vmatprep.subr.mxu0 0.0
    %104 = vmatpush2.msra.mxu0 0.0
    %105 = vmatprep.subr.mxu0 0.0
    %106 = vmatpush2.msra.mxu0 0.0
    %107 = vmatprep.subr.mxu0 0.0
    %108 = vmatpush2.msra.mxu0 0.0
    %109 = vmatprep.subr.mxu0 0.0
    %110 = vmatpush2.msra.mxu0 0.0
    %111 = vmatprep.subr.mxu0 0.0
    %112 = vmatpush2.msra.mxu0 0.0
    %113 = vmatprep.subr.mxu0 0.0
    %114 = vmatpush2.msra.mxu0 0.0
    %115 = vmatprep.subr.mxu0 0.0
    %116 = vmatpush2.msra.mxu0 0.0
    %117 = vmatprep.subr.mxu0 0.0
    %118 = vmatpush2.msra.mxu0 0.0
    %119 = vmatprep.subr.mxu0 0.0
    %120 = vmatpush2.msra.mxu0 0.0
    %121 = vmatprep.subr.mxu0 0.0
    %122 = vmatpush2.msra.mxu0 0.0
    %123 = vmatprep.subr.mxu0 0.0
    %124 = vmatpush2.msra.mxu0 0.0
    %125 = vmatprep.subr.mxu0 0.0
    %126 = vmatpush2.msra.mxu0 0.0
    %127 = vmatprep.mubr.f32.mxu0 0.0
    %128 = vmatmul.mubr.f32.gmra.mxu0 %v58
    %v129 = vpop.f32.mrf.mxu0
    %v130 = vadd.f32 %v54, %v129
    %v131 = vpop.f32.mrf.mxu0
    %132 = vmatprep.mubr.f32.mxu0 0.0
    %133 = vmatmul.mubr.f32.gmra.mxu0 %v61
    %v134 = vpop.f32.mrf.mxu0
    %v135 = vadd.f32 %v54, %v134
    %v136 = vpop.f32.mrf.mxu0
    %137 = vdwg.mxu0
    %139 = vrot.lane.b32.xlu0 %v130, 112
    %v140 = vpop.permute.xlu0 %139
    %vm141 = vcmask 130048
    %v142 = vsel %vm141, %v140, 0
    %v144 = vsel %vm141, %v130, 0
    %146 = vmatprep.subr.mxu0 0.0
    %147 = vmatpush1.xpose.msra.mxu0 0.0
    %148 = vmatprep.subr.mxu0 0.0
    %149 = vmatpush1.xpose.msra.mxu0 0.0
    %150 = vmatprep.subr.mxu0 0.0
    %151 = vmatpush1.xpose.msra.mxu0 0.0
    %152 = vmatprep.subr.mxu0 0.0
    %153 = vmatpush1.xpose.msra.mxu0 0.0
    %154 = vmatprep.subr.mxu0 0.0
    %155 = vmatpush1.xpose.msra.mxu0 0.0
    %156 = vmatprep.subr.mxu0 0.0
    %157 = vmatpush1.xpose.msra.mxu0 0.0
    %158 = vmatprep.subr.mxu0 0.0
    %159 = vmatpush1.xpose.msra.mxu0 0.0
    %160 = vmatprep.subr.mxu0 0.0
    %161 = vmatpush1.xpose.msra.mxu0 0.0
    %162 = vmatprep.subr.mxu0 0.0
    %163 = vmatpush1.xpose.msra.mxu0 0.0
    %164 = vmatprep.subr.mxu0 0.0
    %165 = vmatpush1.xpose.msra.mxu0 0.0
    %166 = vmatprep.subr.mxu0 0.0
    %167 = vmatpush1.xpose.msra.mxu0 0.0
    %168 = vmatprep.subr.mxu0 0.0
    %169 = vmatpush1.xpose.msra.mxu0 0.0
    %170 = vmatprep.subr.mxu0 0.0
    %171 = vmatpush1.xpose.msra.mxu0 0.0
    %172 = vmatprep.subr.mxu0 0.0
    %173 = vmatpush1.xpose.msra.mxu0 0.0
    %174 = vmatprep.subr.mxu0 0.0
    %175 = vmatpush1.xpose.msra.mxu0 0.0
    %176 = vmatprep.subr.mxu0 0.0
    %177 = vmatpush1.xpose.msra.mxu0 %v144
    %178 = vmatprep.subr.mxu0 0.0
    %179 = vmatpush2.xpose.msra.mxu0 0.0
    %180 = vmatprep.subr.mxu0 0.0
    %181 = vmatpush2.xpose.msra.mxu0 0.0
    %182 = vmatprep.subr.mxu0 0.0
    %183 = vmatpush2.xpose.msra.mxu0 0.0
    %184 = vmatprep.subr.mxu0 0.0
    %185 = vmatpush2.xpose.msra.mxu0 0.0
    %186 = vmatprep.subr.mxu0 0.0
    %187 = vmatpush2.xpose.msra.mxu0 0.0
    %188 = vmatprep.subr.mxu0 0.0
    %189 = vmatpush2.xpose.msra.mxu0 0.0
    %190 = vmatprep.subr.mxu0 0.0
    %191 = vmatpush2.xpose.msra.mxu0 0.0
    %192 = vmatprep.subr.mxu0 0.0
    %193 = vmatpush2.xpose.msra.mxu0 0.0
    %194 = vmatprep.subr.mxu0 0.0
    %195 = vmatpush2.xpose.msra.mxu0 0.0
    %196 = vmatprep.subr.mxu0 0.0
    %197 = vmatpush2.xpose.msra.mxu0 0.0
    %198 = vmatprep.subr.mxu0 0.0
    %199 = vmatpush2.xpose.msra.mxu0 0.0
    %200 = vmatprep.subr.mxu0 0.0
    %201 = vmatpush2.xpose.msra.mxu0 0.0
    %202 = vmatprep.subr.mxu0 0.0
    %203 = vmatpush2.xpose.msra.mxu0 0.0
    %204 = vmatprep.subr.mxu0 0.0
    %205 = vmatpush2.xpose.msra.mxu0 0.0
    %206 = vmatprep.subr.mxu0 0.0
    %207 = vmatpush2.xpose.msra.mxu0 0.0
    %208 = vmatprep.subr.mxu0 0.0
    %209 = vmatpush2.xpose.msra.mxu0 0.0
    %210 = vmatprep.mubr.f32.mxu0 0.0
    %211 = vmatmul.mubr.f32.gmra.mxu0 %v142
    %v212 = vpop.f32.mrf.mxu0
    %v213 = vadd.f32 0.0, %v212
    %v214 = vpop.f32.mrf.mxu0
    %215 = vdwg.mxu0
    %217 = vrot.lane.b32.xlu0 %v135, 112
    %v218 = vpop.permute.xlu0 %217
    %v219 = vsel %vm141, %v218, 0
    %v221 = vsel %vm141, %v135, 0
    %223 = vmatprep.subr.mxu0 0.0
    %224 = vmatpush1.xpose.msra.mxu0 0.0
    %225 = vmatprep.subr.mxu0 0.0
    %226 = vmatpush1.xpose.msra.mxu0 0.0
    %227 = vmatprep.subr.mxu0 0.0
    %228 = vmatpush1.xpose.msra.mxu0 0.0
    %229 = vmatprep.subr.mxu0 0.0
    %230 = vmatpush1.xpose.msra.mxu0 0.0
    %231 = vmatprep.subr.mxu0 0.0
    %232 = vmatpush1.xpose.msra.mxu0 0.0
    %233 = vmatprep.subr.mxu0 0.0
    %234 = vmatpush1.xpose.msra.mxu0 0.0
    %235 = vmatprep.subr.mxu0 0.0
    %236 = vmatpush1.xpose.msra.mxu0 0.0
    %237 = vmatprep.subr.mxu0 0.0
    %238 = vmatpush1.xpose.msra.mxu0 0.0
    %239 = vmatprep.subr.mxu0 0.0
    %240 = vmatpush1.xpose.msra.mxu0 0.0
    %241 = vmatprep.subr.mxu0 0.0
    %242 = vmatpush1.xpose.msra.mxu0 0.0
    %243 = vmatprep.subr.mxu0 0.0
    %244 = vmatpush1.xpose.msra.mxu0 0.0
    %245 = vmatprep.subr.mxu0 0.0
    %246 = vmatpush1.xpose.msra.mxu0 0.0
    %247 = vmatprep.subr.mxu0 0.0
    %248 = vmatpush1.xpose.msra.mxu0 0.0
    %249 = vmatprep.subr.mxu0 0.0
    %250 = vmatpush1.xpose.msra.mxu0 0.0
    %251 = vmatprep.subr.mxu0 0.0
    %252 = vmatpush1.xpose.msra.mxu0 0.0
    %253 = vmatprep.subr.mxu0 0.0
    %254 = vmatpush1.xpose.msra.mxu0 %v221
    %255 = vmatprep.subr.mxu0 0.0
    %256 = vmatpush2.xpose.msra.mxu0 0.0
    %257 = vmatprep.subr.mxu0 0.0
    %258 = vmatpush2.xpose.msra.mxu0 0.0
    %259 = vmatprep.subr.mxu0 0.0
    %260 = vmatpush2.xpose.msra.mxu0 0.0
    %261 = vmatprep.subr.mxu0 0.0
    %262 = vmatpush2.xpose.msra.mxu0 0.0
    %263 = vmatprep.subr.mxu0 0.0
    %264 = vmatpush2.xpose.msra.mxu0 0.0
    %265 = vmatprep.subr.mxu0 0.0
    %266 = vmatpush2.xpose.msra.mxu0 0.0
    %267 = vmatprep.subr.mxu0 0.0
    %268 = vmatpush2.xpose.msra.mxu0 0.0
    %269 = vmatprep.subr.mxu0 0.0
    %270 = vmatpush2.xpose.msra.mxu0 0.0
    %271 = vmatprep.subr.mxu0 0.0
    %272 = vmatpush2.xpose.msra.mxu0 0.0
    %273 = vmatprep.subr.mxu0 0.0
    %274 = vmatpush2.xpose.msra.mxu0 0.0
    %275 = vmatprep.subr.mxu0 0.0
    %276 = vmatpush2.xpose.msra.mxu0 0.0
    %277 = vmatprep.subr.mxu0 0.0
    %278 = vmatpush2.xpose.msra.mxu0 0.0
    %279 = vmatprep.subr.mxu0 0.0
    %280 = vmatpush2.xpose.msra.mxu0 0.0
    %281 = vmatprep.subr.mxu0 0.0
    %282 = vmatpush2.xpose.msra.mxu0 0.0
    %283 = vmatprep.subr.mxu0 0.0
    %284 = vmatpush2.xpose.msra.mxu0 0.0
    %285 = vmatprep.subr.mxu0 0.0
    %286 = vmatpush2.xpose.msra.mxu0 0.0
    %287 = vmatprep.mubr.f32.mxu0 0.0
    %288 = vmatmul.mubr.f32.gmra.mxu0 %v219
    %v289 = vpop.f32.mrf.mxu0
    %v290 = vadd.f32 0.0, %v289
    %v291 = vpop.f32.mrf.mxu0
    %292 = vdwg.mxu0
    %v293 = vlaneseq
    %v294 = vshrl.u32 %v293, 7
    %v295 = vlaneseq
    %v296 = vand.u32 %v295, 127
    %vm297 = vcmp.ge.s32.totalorder %v294, %v296
    %v298 = vsel %vm297, 1, 0
    %vm299 = vcmp.eq.s32.totalorder %v298, 1
    %v300 = vsel %vm299, %v213, -inf
    %v301 = vsel %vm299, %v290, -inf
    %vm302 = vcmask 64512
    %v303 = vsel %vm302, %v300, -inf
    %v304 = vrot.slane %v303, 4
    %v305 = vmax.f32 %v303, %v304
    %v306 = vrot.slane %v305, 2
    %v307 = vmax.f32 %v305, %v306
    %v308 = vrot.slane %v307, 1
    %v309 = vmax.f32 %v307, %v308
    %v310 = vsel %vm302, %v301, -inf
    %v311 = vrot.slane %v310, 4
    %v312 = vmax.f32 %v310, %v311
    %v313 = vrot.slane %v312, 2
    %v314 = vmax.f32 %v312, %v313
    %v315 = vrot.slane %v314, 1
    %v316 = vmax.f32 %v314, %v315
    %v317 = vsub.f32 %v300, %v309
    %v318 = vsub.f32 %v301, %v316
    %v319 = vmul.f32 %v317, 1.442695
    %v320 = vpow.pop %v319
    %v321 = vmul.f32 %v318, 1.442695
    %v322 = vpow.pop %v321
    %v323 = vsel %vm302, %v320, 0.0
    %v324 = vrot.slane %v323, 4
    %v325 = vadd.f32 %v323, %v324
    %v326 = vrot.slane %v325, 2
    %v327 = vadd.f32 %v325, %v326
    %v328 = vrot.slane %v327, 1
    %v329 = vadd.f32 %v327, %v328
    %v330 = vsel %vm302, %v322, 0.0
    %v331 = vrot.slane %v330, 4
    %v332 = vadd.f32 %v330, %v331
    %v333 = vrot.slane %v332, 2
    %v334 = vadd.f32 %v332, %v333
    %v335 = vrot.slane %v334, 1
    %v336 = vadd.f32 %v334, %v335
    %v337 = vrcp.pop %v329
    %v338 = vrcp.pop %v336
    %v339 = vmul.f32 %v320, %v337
    %v340 = vmul.f32 %v322, %v338
    %341 = vrot.lane.b32.xlu0 %v130, 96
    %v342 = vpop.permute.xlu0 %341
    %v345 = vsel %vm302, %v339, 0
    %347 = vmatprep.subr.mxu0 0.0
    %348 = vmatpush1.msra.mxu0 0.0
    %349 = vmatprep.subr.mxu0 0.0
    %350 = vmatpush1.msra.mxu0 0.0
    %351 = vmatprep.subr.mxu0 0.0
    %352 = vmatpush1.msra.mxu0 0.0
    %353 = vmatprep.subr.mxu0 0.0
    %354 = vmatpush1.msra.mxu0 0.0
    %355 = vmatprep.subr.mxu0 0.0
    %356 = vmatpush1.msra.mxu0 0.0
    %357 = vmatprep.subr.mxu0 0.0
    %358 = vmatpush1.msra.mxu0 0.0
    %359 = vmatprep.subr.mxu0 0.0
    %360 = vmatpush1.msra.mxu0 0.0
    %361 = vmatprep.subr.mxu0 0.0
    %362 = vmatpush1.msra.mxu0 0.0
    %363 = vmatprep.subr.mxu0 0.0
    %364 = vmatpush1.msra.mxu0 0.0
    %365 = vmatprep.subr.mxu0 0.0
    %366 = vmatpush1.msra.mxu0 0.0
    %367 = vmatprep.subr.mxu0 0.0
    %368 = vmatpush1.msra.mxu0 0.0
    %369 = vmatprep.subr.mxu0 0.0
    %370 = vmatpush1.msra.mxu0 0.0
    %371 = vmatprep.subr.mxu0 0.0
    %372 = vmatpush1.msra.mxu0 0.0
    %373 = vmatprep.subr.mxu0 0.0
    %374 = vmatpush1.msra.mxu0 0.0
    %375 = vmatprep.subr.mxu0 0.0
    %376 = vmatpush1.msra.mxu0 0.0
    %377 = vmatprep.subr.mxu0 0.0
    %378 = vmatpush1.msra.mxu0 %v342
    %379 = vmatprep.subr.mxu0 0.0
    %380 = vmatpush2.msra.mxu0 0.0
    %381 = vmatprep.subr.mxu0 0.0
    %382 = vmatpush2.msra.mxu0 0.0
    %383 = vmatprep.subr.mxu0 0.0
    %384 = vmatpush2.msra.mxu0 0.0
    %385 = vmatprep.subr.mxu0 0.0
    %386 = vmatpush2.msra.mxu0 0.0
    %387 = vmatprep.subr.mxu0 0.0
    %388 = vmatpush2.msra.mxu0 0.0
    %389 = vmatprep.subr.mxu0 0.0
    %390 = vmatpush2.msra.mxu0 0.0
    %391 = vmatprep.subr.mxu0 0.0
    %392 = vmatpush2.msra.mxu0 0.0
    %393 = vmatprep.subr.mxu0 0.0
    %394 = vmatpush2.msra.mxu0 0.0
    %395 = vmatprep.subr.mxu0 0.0
    %396 = vmatpush2.msra.mxu0 0.0
    %397 = vmatprep.subr.mxu0 0.0
    %398 = vmatpush2.msra.mxu0 0.0
    %399 = vmatprep.subr.mxu0 0.0
    %400 = vmatpush2.msra.mxu0 0.0
    %401 = vmatprep.subr.mxu0 0.0
    %402 = vmatpush2.msra.mxu0 0.0
    %403 = vmatprep.subr.mxu0 0.0
    %404 = vmatpush2.msra.mxu0 0.0
    %405 = vmatprep.subr.mxu0 0.0
    %406 = vmatpush2.msra.mxu0 0.0
    %407 = vmatprep.subr.mxu0 0.0
    %408 = vmatpush2.msra.mxu0 0.0
    %409 = vmatprep.subr.mxu0 0.0
    %410 = vmatpush2.msra.mxu0 0.0
    %411 = vmatprep.mubr.f32.mxu0 0.0
    %412 = vmatmul.mubr.f32.gmra.mxu0 %v345
    %v413 = vpop.f32.mrf.mxu0
    %v414 = vadd.f32 0.0, %v413
    %v415 = vpop.f32.mrf.mxu0
    %416 = vdwg.mxu0
    %417 = vrot.lane.b32.xlu0 %v135, 96
    %v418 = vpop.permute.xlu0 %417
    %v421 = vsel %vm302, %v340, 0
    %423 = vmatprep.subr.mxu0 0.0
    %424 = vmatpush1.msra.mxu0 0.0
    %425 = vmatprep.subr.mxu0 0.0
    %426 = vmatpush1.msra.mxu0 0.0
    %427 = vmatprep.subr.mxu0 0.0
    %428 = vmatpush1.msra.mxu0 0.0
    %429 = vmatprep.subr.mxu0 0.0
    %430 = vmatpush1.msra.mxu0 0.0
    %431 = vmatprep.subr.mxu0 0.0
    %432 = vmatpush1.msra.mxu0 0.0
    %433 = vmatprep.subr.mxu0 0.0
    %434 = vmatpush1.msra.mxu0 0.0
    %435 = vmatprep.subr.mxu0 0.0
    %436 = vmatpush1.msra.mxu0 0.0
    %437 = vmatprep.subr.mxu0 0.0
    %438 = vmatpush1.msra.mxu0 0.0
    %439 = vmatprep.subr.mxu0 0.0
    %440 = vmatpush1.msra.mxu0 0.0
    %441 = vmatprep.subr.mxu0 0.0
    %442 = vmatpush1.msra.mxu0 0.0
    %443 = vmatprep.subr.mxu0 0.0
    %444 = vmatpush1.msra.mxu0 0.0
    %445 = vmatprep.subr.mxu0 0.0
    %446 = vmatpush1.msra.mxu0 0.0
    %447 = vmatprep.subr.mxu0 0.0
    %448 = vmatpush1.msra.mxu0 0.0
    %449 = vmatprep.subr.mxu0 0.0
    %450 = vmatpush1.msra.mxu0 0.0
    %451 = vmatprep.subr.mxu0 0.0
    %452 = vmatpush1.msra.mxu0 0.0
    %453 = vmatprep.subr.mxu0 0.0
    %454 = vmatpush1.msra.mxu0 %v418
    %455 = vmatprep.subr.mxu0 0.0
    %456 = vmatpush2.msra.mxu0 0.0
    %457 = vmatprep.subr.mxu0 0.0
    %458 = vmatpush2.msra.mxu0 0.0
    %459 = vmatprep.subr.mxu0 0.0
    %460 = vmatpush2.msra.mxu0 0.0
    %461 = vmatprep.subr.mxu0 0.0
    %462 = vmatpush2.msra.mxu0 0.0
    %463 = vmatprep.subr.mxu0 0.0
    %464 = vmatpush2.msra.mxu0 0.0
    %465 = vmatprep.subr.mxu0 0.0
    %466 = vmatpush2.msra.mxu0 0.0
    %467 = vmatprep.subr.mxu0 0.0
    %468 = vmatpush2.msra.mxu0 0.0
    %469 = vmatprep.subr.mxu0 0.0
    %470 = vmatpush2.msra.mxu0 0.0
    %471 = vmatprep.subr.mxu0 0.0
    %472 = vmatpush2.msra.mxu0 0.0
    %473 = vmatprep.subr.mxu0 0.0
    %474 = vmatpush2.msra.mxu0 0.0
    %475 = vmatprep.subr.mxu0 0.0
    %476 = vmatpush2.msra.mxu0 0.0
    %477 = vmatprep.subr.mxu0 0.0
    %478 = vmatpush2.msra.mxu0 0.0
    %479 = vmatprep.subr.mxu0 0.0
    %480 = vmatpush2.msra.mxu0 0.0
    %481 = vmatprep.subr.mxu0 0.0
    %482 = vmatpush2.msra.mxu0 0.0
    %483 = vmatprep.subr.mxu0 0.0
    %484 = vmatpush2.msra.mxu0 0.0
    %485 = vmatprep.subr.mxu0 0.0
    %486 = vmatpush2.msra.mxu0 0.0
    %487 = vmatprep.mubr.f32.mxu0 0.0
    %488 = vmatmul.mubr.f32.gmra.mxu0 %v421
    %v489 = vpop.f32.mrf.mxu0
    %v490 = vadd.f32 0.0, %v489
    %v491 = vpop.f32.mrf.mxu0
    %492 = vdwg.mxu0
    %493 = vst.msk [vmem:[#allocation7] sm:$0xff] %vm141, %v414
    %494 = vst.msk [vmem:[#allocation7 + $0x8] sm:$0xff] %vm141, %v490
    // Predicated region
    $region22: #{tpu_custom_call.1} parent=1 // pred_check
      _
    $region23: #{tpu_custom_call.1} parent=1 // pred_check_branch
      %496 = sbr.rel (0) target = $region25
    $region24: #{tpu_custom_call.1} parent=1 // pred_region
      %s498 = ssub.s32 256, 256
      %499 = vsyncadd [#allocation4], %s498
      %s500 = sshll.u32 [#allocation7], 4
      %s501 = int_to_ptr.vmem [resolvable:$true] %s500
      %506 = dma.vmem_to_hbm [thread:$0]  %s501, 256, %s3, [#allocation4], 128, 128, 8
    $region25: #{tpu_custom_call.1} parent=1 // pred_fallthru
      _
    // Predicated region
    $region26: #{tpu_custom_call.1} parent=1 // pred_check
      _
    $region27: #{tpu_custom_call.1} parent=1 // pred_check_branch
      %508 = sbr.rel (0) target = $region29
    $region28: #{tpu_custom_call.1} parent=1 // pred_region
      %509 = dma.done [#allocation4], 256
    $region29: #{tpu_custom_call.1} parent=1 // pred_fallthru
      _
    %510 = vsyncpa [#allocation3], 1
    %511 = vsyncpa [#allocation6], 1
    %512 = vsyncpa [#allocation4], 1

</llo_original>
